<compile_context>
chip_gen: v7x
topology: tpu7x:2x2x1
jax: 0.10.0
libtpu: 0.0.40
codegen_flags: <defaults>
</compile_context>

<pallas_src>
import jax
import jax.numpy as jnp
from jax.experimental import pallas as pl
from jax.experimental.pallas import tpu as pltpu


def _film_kernel(x_ref, w_ref, b_ref, f_ref, p_ref, o_ref):
    # x_ref: (tm, D_in), w_ref: (D_in, H), b_ref/f_ref/p_ref: (1, H)
    # o_ref: (tm, H)
    y = jnp.dot(x_ref[...], w_ref[...], preferred_element_type=jnp.float32)
    y = y + b_ref[...]                              # bias (exact module order)
    # FiLM modulation + sin; (1, H) params broadcast over the tm rows in-kernel.
    o_ref[...] = jnp.sin(f_ref[...] * y + p_ref[...]).astype(o_ref.dtype)


def film_layer(x, weight, bias, freq, phase_shift, *, tm=256):
    """FiLMLayer forward.

    x:            (B, N, D_in)  float32
    weight:       (H, D_in)     float32   (PyTorch nn.Linear layout)
    bias:         (H,)          float32
    freq:         (B, 1, H)     float32
    phase_shift:  (B, 1, H)     float32
    returns:      (B, N, H)     float32
    """
    B, N, D_in = x.shape
    H = weight.shape[0]

    # Row tile: use the full sequence if it is shorter than the requested
    # tile (a block equal to the full dim is always legal); otherwise keep
    # tm (a multiple of 8) and zero-pad N up to a multiple of it.
    tm_eff = tm if N >= tm else N
    n_tiles = pl.cdiv(N, tm_eff)
    N_pad = n_tiles * tm_eff
    if N_pad != N:
        x = jnp.pad(x, ((0, 0), (0, N_pad - N), (0, 0)))

    w_t = weight.T               # (D_in, H), stays resident in VMEM
    b2 = bias.reshape(1, H)      # (1, H)

    out = pl.pallas_call(
        _film_kernel,
        out_shape=jax.ShapeDtypeStruct((B, N_pad, H), x.dtype),
        grid_spec=pltpu.PrefetchScalarGridSpec(
            num_scalar_prefetch=0,
            grid=(B, n_tiles),
            in_specs=[
                # x rows: one (tm, D_in) tile per (batch, row-tile)
                pl.BlockSpec((None, tm_eff, D_in), lambda b, i: (b, i, 0)),
                # weight: resident across the whole grid
                pl.BlockSpec((D_in, H), lambda b, i: (0, 0)),
                # bias: tiny resident block
                pl.BlockSpec((1, H), lambda b, i: (0, 0)),
                # FiLM params: one (1, H) block per batch, broadcast in-kernel
                pl.BlockSpec((None, 1, H), lambda b, i: (b, 0, 0)),
                pl.BlockSpec((None, 1, H), lambda b, i: (b, 0, 0)),
            ],
            out_specs=pl.BlockSpec((None, tm_eff, H), lambda b, i: (b, i, 0)),
        ),
        compiler_params=pltpu.CompilerParams(
            dimension_semantics=("parallel", "parallel")),
    )(x, w_t, b2, freq, phase_shift)

    if N_pad != N:
        out = out[:, :N, :]
    return out


if __name__ == "__main__":
    # Small shapes consistent with the module's forward.
    B, N, D_in, H = 2, 8, 16, 32

    key = jax.random.PRNGKey(0)
    kx, kf, kp, kw, kb = jax.random.split(key, 5)

    x = jax.random.normal(kx, (B, N, D_in), dtype=jnp.float32)
    freq = jax.random.normal(kf, (B, 1, H), dtype=jnp.float32) * 15.0 + 30.0
    phase_shift = jax.random.normal(kp, (B, 1, H), dtype=jnp.float32)

    # Deterministic parameter init (PyTorch nn.Linear-like uniform bounds).
    bound = 1.0 / (D_in ** 0.5)
    weight = jax.random.uniform(kw, (H, D_in), jnp.float32, -bound, bound)
    bias = jax.random.uniform(kb, (H,), jnp.float32, -bound, bound)

    out = film_layer(x, weight, bias, freq, phase_shift)
    out = jax.block_until_ready(out)

    # Reference check in plain JAX (same semantics as the PyTorch forward).
    ref = jnp.sin(freq * (jnp.einsum("bnd,hd->bnh", x, weight) + bias) + phase_shift)
    assert out.shape == (B, N, H)
    assert jnp.allclose(out, ref, atol=1e-5, rtol=1e-5), "mismatch vs reference"

    print("KERNEL_OK")
</pallas_src>

<mosaic_0001>
module attributes {stable_mosaic.version = 11 : i64} {
  func.func @_film_kernel(%arg0: i32, %arg1: i32, %arg2: memref<1x8x16xf32, #tpu.memory_space<vmem>>, %arg3: memref<16x32xf32, #tpu.memory_space<vmem>>, %arg4: memref<1x32xf32, #tpu.memory_space<vmem>>, %arg5: memref<1x1x32xf32, #tpu.memory_space<vmem>>, %arg6: memref<1x1x32xf32, #tpu.memory_space<vmem>>, %arg7: memref<1x8x32xf32, #tpu.memory_space<vmem>>) attributes {dimension_semantics = [#tpu.dimension_semantics<parallel>, #tpu.dimension_semantics<parallel>], iteration_bounds = array<i64: 2, 1>, scalar_prefetch = 0 : i64, scratch_operands = 0 : i64, tpu.core_type = #tpu.core_type<tc>, window_params = [{transform_indices = @transform_0, window_bounds = array<i64: 1, 8, 16>}, {pipeline_mode = #tpu.pipeline_mode<synchronous>, transform_indices = @transform_1, window_bounds = array<i64: 16, 32>}, {pipeline_mode = #tpu.pipeline_mode<synchronous>, transform_indices = @transform_2, window_bounds = array<i64: 1, 32>}, {transform_indices = @transform_3, window_bounds = array<i64: 1, 1, 32>}, {transform_indices = @transform_4, window_bounds = array<i64: 1, 1, 32>}, {transform_indices = @transform_5, window_bounds = array<i64: 1, 8, 32>}]} {
    %c0 = arith.constant 0 : index
    %c0_0 = arith.constant 0 : index
    %c0_1 = arith.constant 0 : index
    %0 = vector.load %arg2[%c0, %c0_0, %c0_1] : memref<1x8x16xf32, #tpu.memory_space<vmem>>, vector<1x8x16xf32>
    %1 = vector.shape_cast %0 : vector<1x8x16xf32> to vector<8x16xf32>
    %c0_2 = arith.constant 0 : index
    %c0_3 = arith.constant 0 : index
    %2 = vector.load %arg3[%c0_2, %c0_3] : memref<16x32xf32, #tpu.memory_space<vmem>>, vector<16x32xf32>
    %cst = arith.constant dense<0.000000e+00> : vector<8x32xf32>
    %3 = tpu.matmul %1, %2, %cst {dimension_numbers = #tpu.dot_dimension_numbers<[1], [0], [0], [1], [0, 0, 1, 1], [], []>} : vector<8x16xf32>, vector<16x32xf32>, vector<8x32xf32> -> vector<8x32xf32>
    %c0_4 = arith.constant 0 : index
    %c0_5 = arith.constant 0 : index
    %4 = vector.load %arg4[%c0_4, %c0_5] : memref<1x32xf32, #tpu.memory_space<vmem>>, vector<1x32xf32>
    %5 = vector.broadcast %4 : vector<1x32xf32> to vector<8x32xf32>
    %6 = arith.addf %3, %5 : vector<8x32xf32>
    %c0_6 = arith.constant 0 : index
    %c0_7 = arith.constant 0 : index
    %c0_8 = arith.constant 0 : index
    %7 = vector.load %arg5[%c0_6, %c0_7, %c0_8] : memref<1x1x32xf32, #tpu.memory_space<vmem>>, vector<1x1x32xf32>
    %8 = vector.shape_cast %7 : vector<1x1x32xf32> to vector<1x32xf32>
    %9 = vector.broadcast %8 : vector<1x32xf32> to vector<8x32xf32>
    %10 = arith.mulf %9, %6 : vector<8x32xf32>
    %c0_9 = arith.constant 0 : index
    %c0_10 = arith.constant 0 : index
    %c0_11 = arith.constant 0 : index
    %11 = vector.load %arg6[%c0_9, %c0_10, %c0_11] : memref<1x1x32xf32, #tpu.memory_space<vmem>>, vector<1x1x32xf32>
    %12 = vector.shape_cast %11 : vector<1x1x32xf32> to vector<1x32xf32>
    %13 = vector.broadcast %12 : vector<1x32xf32> to vector<8x32xf32>
    %14 = arith.addf %10, %13 : vector<8x32xf32>
    %15 = math.sin %14 : vector<8x32xf32>
    %c0_12 = arith.constant 0 : index
    %c0_13 = arith.constant 0 : index
    %c0_14 = arith.constant 0 : index
    %16 = vector.load %arg7[%c0_12, %c0_13, %c0_14] : memref<1x8x32xf32, #tpu.memory_space<vmem>>, vector<1x8x32xf32>
    %17 = vector.shape_cast %16 : vector<1x8x32xf32> to vector<8x32xf32>
    %18 = vector.shape_cast %15 : vector<8x32xf32> to vector<1x8x32xf32>
    tpu.vector_store %arg7[%c0_12, %c0_13, %c0_14], %18 {strides = array<i32>} : memref<1x8x32xf32, #tpu.memory_space<vmem>>, vector<1x8x32xf32>,
    return
  }
  func.func @transform_0(%arg0: i32, %arg1: i32) -> (i32, i32, i32) {
    %c0_i32 = arith.constant 0 : i32
    %c0_i32_0 = arith.constant 0 : i32
    return %arg0, %arg1, %c0_i32 : i32, i32, i32
  }
  func.func @transform_1(%arg0: i32, %arg1: i32) -> (i32, i32) {
    %c0_i32 = arith.constant 0 : i32
    %c0_i32_0 = arith.constant 0 : i32
    %c0_i32_1 = arith.constant 0 : i32
    return %c0_i32, %c0_i32_0 : i32, i32
  }
  func.func @transform_2(%arg0: i32, %arg1: i32) -> (i32, i32) {
    %c0_i32 = arith.constant 0 : i32
    %c0_i32_0 = arith.constant 0 : i32
    %c0_i32_1 = arith.constant 0 : i32
    return %c0_i32, %c0_i32_0 : i32, i32
  }
  func.func @transform_3(%arg0: i32, %arg1: i32) -> (i32, i32, i32) {
    %c0_i32 = arith.constant 0 : i32
    %c0_i32_0 = arith.constant 0 : i32
    %c0_i32_1 = arith.constant 0 : i32
    return %arg0, %c0_i32, %c0_i32_0 : i32, i32, i32
  }
  func.func @transform_4(%arg0: i32, %arg1: i32) -> (i32, i32, i32) {
    %c0_i32 = arith.constant 0 : i32
    %c0_i32_0 = arith.constant 0 : i32
    %c0_i32_1 = arith.constant 0 : i32
    return %arg0, %c0_i32, %c0_i32_0 : i32, i32, i32
  }
  func.func @transform_5(%arg0: i32, %arg1: i32) -> (i32, i32, i32) {
    %c0_i32 = arith.constant 0 : i32
    %c0_i32_0 = arith.constant 0 : i32
    return %arg0, %arg1, %c0_i32 : i32, i32, i32
  }
}

</mosaic_0001>

<llo_original>
// kernel: tpu_custom_call.1
$region0: #{tpu_custom_call.1}
  #allocation0 [shape = 'u32[]', space=smem, size = 0x4, offset = 0x4, fixed_abs, tag = 'smem constant byte address 0x4 - core index']
  #allocation1 [shape = 'u32[144,128]{1,0:T(1,128)}', space=vmem, size = 0x12000, scoped, tag = 'internal scratch']
  %s0 = inlined_call_operand.hbm [shape: f32[2,8,16], index: 0, kind: input, shape index: {}]
  %s1 = inlined_call_operand.hbm [shape: f32[16,32], index: 1, kind: input, shape index: {}]
  %s2 = inlined_call_operand.vmem [shape: f32[1,32], index: 2, kind: input, shape index: {}]
  %s3 = inlined_call_operand.vmem [shape: f32[2,1,32], index: 3, kind: input, shape index: {}]
  %s4 = inlined_call_operand.vmem [shape: f32[2,1,32], index: 4, kind: input, shape index: {}]
  %s5 = inlined_call_operand.hbm [shape: f32[2,8,32], index: 5, kind: output, shape index: {}]
  %s6 = sld [smem:[#allocation0]]
  $region61: #{tpu_custom_call.1} parent=0
    _
  %s8 = ssub.s32 1, %s6
  %s9 = scalar_select 0, %s8, %s6
  $region1: #{tpu_custom_call.1} parent=0
    #allocation2 [shape = 'u8[8192]{0}', space=vmem, size = 0x2000, scoped, tag = 'input window, operand 0']
    #allocation3 [shape = 's32[2]{0}', space=sflag, size = 0x8, scoped, tag = 'scoped memory for tpu_custom_call.1']
    #allocation4 [shape = 's32[2]{0}', space=sflag, size = 0x8, scoped, tag = 'scoped memory for tpu_custom_call.1']
    #allocation5 [shape = 'u8[8192]{0}', space=vmem, size = 0x2000, scoped, tag = 'input window, operand 1, single buffered']
    #allocation6 [shape = 's32[1]{0}', space=sflag, size = 0x4, scoped, tag = 'scoped memory for tpu_custom_call.1']
    #allocation7 [shape = 'u8[8192]{0}', space=vmem, size = 0x2000, scoped, tag = 'output window, operand 0']
    %10 = vsyncpa [#allocation3], 0
    %s11 = scalar_lea.sflag [#allocation3], 1
    %12 = vsyncpa %s11, 0
    %13 = vsyncpa [#allocation6], 0
    %14 = vsyncpa [#allocation4], 0
    %s15 = scalar_lea.sflag [#allocation4], 1
    %16 = vsyncpa %s15, 0
    loop: start=0, step=1, limit=4
    $region2: #{tpu_custom_call.1} parent=1 // loop_pre_header
      _
    $region3: #{tpu_custom_call.1} parent=1 // loop_header
      %s18 = sphi 0, %s22
      %p19 = scmp.ge.s32.totalorder %s18, 4
      %s25 = sphi 0, %s37
      %s26 = sphi 0, %s33
      %s27 = sphi 0, %s25
      %s28 = sphi 0, %s26
      %s29 = sphi 0, %s27
      %s30 = sphi 0, %s28
      %s42 = sphi 0, %s44
      %s45 = sphi 0, %s42
      %s46 = sphi 0, %s45
      %s62 = sphi 0, %s46
      %s66 = sphi 0, %s66
      %s68 = sphi 0, %s66
      %s69 = sphi 0, %s68
      %s83 = sphi 0, %s69
      %s87 = sphi 0, %s87
      %s89 = sphi 0, %s87
      %s90 = sphi 0, %s89
      %s104 = sphi 0, %s90
      %s110 = sphi 0, %s112
      %s113 = sphi 0, %s110
      %s114 = sphi 0, %s113
      %s130 = sphi 0, %s114
      %s136 = sphi 0, %s138
      %s139 = sphi 0, %s136
      %s140 = sphi 0, %s139
      %s156 = sphi 0, %s140
      %s164 = sphi 0, %s166
      %s167 = sphi 0, %s164
      %s168 = sphi 0, %s167
      %s184 = sphi 0, %s168
    $region4: #{tpu_custom_call.1} parent=1 // loop_header_branch
      %21 = sbr.rel (%p19) target = $region8
    $region5: #{tpu_custom_call.1} parent=1 // loop_body
      %s23 = ssub.s32 %s18, 1
      %s24 = ssub.s32 %s18, 2
      %s31 = sadd.s32 1, %s26
      %p32 = scmp.ge.s32.totalorder %s31, 1
      %s33 = scalar_select %p32, 0, %s31
      %s34 = sadd.s32 1, %s25
      %s35 = scalar_select %p32, %s34, %s25
      %p36 = scmp.ge.s32.totalorder %s35, 2
      %s37 = scalar_select %p36, 0, %s35
      %s38 = ssub.s32 %s25, %s37
      %s39 = ssub.s32 %s26, %s33
      %s40 = sor.u32 %s38, %s39
      %p41 = scmp.eq.s32.totalorder %s40, 0
      %s43 = sadd.s32 %s42, 1
      %s44 = scalar_select %p41, %s42, %s43
      %p47 = pneg %p41
      %p48 = scmp.eq.s32.totalorder %s18, 1
      %p49 = por %p47, %p48
      %p50 = scmp.ne.s32.totalorder %s42, %s45
      %p51 = scmp.eq.s32.totalorder %s18, 0
      %p52 = por %p50, %p51
      %p53 = scmp.ne.s32.totalorder %s42, %s45
      %p54 = scmp.eq.s32.totalorder %s23, 1
      %p55 = por %p53, %p54
      %p56 = scmp.ne.s32.totalorder %s45, %s46
      %p57 = scmp.eq.s32.totalorder %s23, 0
      %p58 = por %p56, %p57
      %p59 = scmp.ne.s32.totalorder %s45, %s46
      %p60 = scmp.eq.s32.totalorder %s24, 1
      %p61 = por %p59, %p60
      %p63 = scmp.ne.s32.totalorder %s46, %s62
      %p64 = scmp.eq.s32.totalorder %s24, 0
      %p65 = por %p63, %p64
      %s67 = sadd.s32 %s66, 1
      %p70 = scmp.eq.s32.totalorder %s18, 1
      %p71 = scmp.ne.s32.totalorder %s66, %s68
      %p72 = scmp.eq.s32.totalorder %s18, 0
      %p73 = por %p71, %p72
      %p74 = scmp.ne.s32.totalorder %s66, %s68
      %p75 = scmp.eq.s32.totalorder %s23, 1
      %p76 = por %p74, %p75
      %p77 = scmp.ne.s32.totalorder %s68, %s69
      %p78 = scmp.eq.s32.totalorder %s23, 0
      %p79 = por %p77, %p78
      %p80 = scmp.ne.s32.totalorder %s68, %s69
      %p81 = scmp.eq.s32.totalorder %s24, 1
      %p82 = por %p80, %p81
      %p84 = scmp.ne.s32.totalorder %s69, %s83
      %p85 = scmp.eq.s32.totalorder %s24, 0
      %p86 = por %p84, %p85
      %s88 = sadd.s32 %s87, 1
      %p91 = scmp.eq.s32.totalorder %s18, 1
      %p92 = scmp.ne.s32.totalorder %s87, %s89
      %p93 = scmp.eq.s32.totalorder %s18, 0
      %p94 = por %p92, %p93
      %p95 = scmp.ne.s32.totalorder %s87, %s89
      %p96 = scmp.eq.s32.totalorder %s23, 1
      %p97 = por %p95, %p96
      %p98 = scmp.ne.s32.totalorder %s89, %s90
      %p99 = scmp.eq.s32.totalorder %s23, 0
      %p100 = por %p98, %p99
      %p101 = scmp.ne.s32.totalorder %s89, %s90
      %p102 = scmp.eq.s32.totalorder %s24, 1
      %p103 = por %p101, %p102
      %p105 = scmp.ne.s32.totalorder %s90, %s104
      %p106 = scmp.eq.s32.totalorder %s24, 0
      %p107 = por %p105, %p106
      %s108 = ssub.s32 %s25, %s37
      %p109 = scmp.eq.s32.totalorder %s108, 0
      %s111 = sadd.s32 %s110, 1
      %s112 = scalar_select %p109, %s110, %s111
      %p115 = pneg %p109
      %p116 = scmp.eq.s32.totalorder %s18, 1
      %p117 = por %p115, %p116
      %p118 = scmp.ne.s32.totalorder %s110, %s113
      %p119 = scmp.eq.s32.totalorder %s18, 0
      %p120 = por %p118, %p119
      %p121 = scmp.ne.s32.totalorder %s110, %s113
      %p122 = scmp.eq.s32.totalorder %s23, 1
      %p123 = por %p121, %p122
      %p124 = scmp.ne.s32.totalorder %s113, %s114
      %p125 = scmp.eq.s32.totalorder %s23, 0
      %p126 = por %p124, %p125
      %p127 = scmp.ne.s32.totalorder %s113, %s114
      %p128 = scmp.eq.s32.totalorder %s24, 1
      %p129 = por %p127, %p128
      %p131 = scmp.ne.s32.totalorder %s114, %s130
      %p132 = scmp.eq.s32.totalorder %s24, 0
      %p133 = por %p131, %p132
      %s134 = ssub.s32 %s25, %s37
      %p135 = scmp.eq.s32.totalorder %s134, 0
      %s137 = sadd.s32 %s136, 1
      %s138 = scalar_select %p135, %s136, %s137
      %p141 = pneg %p135
      %p142 = scmp.eq.s32.totalorder %s18, 1
      %p143 = por %p141, %p142
      %p144 = scmp.ne.s32.totalorder %s136, %s139
      %p145 = scmp.eq.s32.totalorder %s18, 0
      %p146 = por %p144, %p145
      %p147 = scmp.ne.s32.totalorder %s136, %s139
      %p148 = scmp.eq.s32.totalorder %s23, 1
      %p149 = por %p147, %p148
      %p150 = scmp.ne.s32.totalorder %s139, %s140
      %p151 = scmp.eq.s32.totalorder %s23, 0
      %p152 = por %p150, %p151
      %p153 = scmp.ne.s32.totalorder %s139, %s140
      %p154 = scmp.eq.s32.totalorder %s24, 1
      %p155 = por %p153, %p154
      %p157 = scmp.ne.s32.totalorder %s140, %s156
      %p158 = scmp.eq.s32.totalorder %s24, 0
      %p159 = por %p157, %p158
      %s160 = ssub.s32 %s25, %s37
      %s161 = ssub.s32 %s26, %s33
      %s162 = sor.u32 %s160, %s161
      %p163 = scmp.eq.s32.totalorder %s162, 0
      %s165 = sadd.s32 %s164, 1
      %s166 = scalar_select %p163, %s164, %s165
      %p169 = pneg %p163
      %p170 = scmp.eq.s32.totalorder %s18, 1
      %p171 = por %p169, %p170
      %p172 = scmp.ne.s32.totalorder %s164, %s167
      %p173 = scmp.eq.s32.totalorder %s18, 0
      %p174 = por %p172, %p173
      %p175 = scmp.ne.s32.totalorder %s164, %s167
      %p176 = scmp.eq.s32.totalorder %s23, 1
      %p177 = por %p175, %p176
      %p178 = scmp.ne.s32.totalorder %s167, %s168
      %p179 = scmp.eq.s32.totalorder %s23, 0
      %p180 = por %p178, %p179
      %p181 = scmp.ne.s32.totalorder %s167, %s168
      %p182 = scmp.eq.s32.totalorder %s24, 1
      %p183 = por %p181, %p182
      %p185 = scmp.ne.s32.totalorder %s168, %s184
      %p186 = scmp.eq.s32.totalorder %s24, 0
      %p187 = por %p185, %p186
      %p188 = scmp.le.s32.totalorder 1, %s18
      %p189 = scmp.lt.s32.totalorder %s18, 3
      %p190 = pnand %p188, %p189
      %p191 = pneg %p190
      // Predicated region
      $region9: #{tpu_custom_call.1} parent=5 // pred_check
        _
      $region10: #{tpu_custom_call.1} parent=5 // pred_check_branch
        %193 = sbr.rel (%p190) target = $region12
      $region11: #{tpu_custom_call.1} parent=5 // pred_region
        %s194 = ssub.s32 %s18, 1
        // Predicated region
        $region13: #{tpu_custom_call.1} parent=11 // pred_check
          %p195 = pneg %p79
        $region14: #{tpu_custom_call.1} parent=11 // pred_check_branch
          %197 = sbr.rel (%p195) target = $region16
        $region15: #{tpu_custom_call.1} parent=11 // pred_region
          %s199 = ssub.s32 256, 256
          %200 = vsyncadd [#allocation6], %s199
          %s201 = sshll.u32 [#allocation5], 4
          %s202 = int_to_ptr.vmem [resolvable:$true] %s201
          %207 = dma.hbm_to_vmem [thread:$0]  %s1, 256, %s202, [#allocation6], 128, 128, 8
        $region16: #{tpu_custom_call.1} parent=11 // pred_fallthru
          _
        // Predicated region
        $region17: #{tpu_custom_call.1} parent=11 // pred_check
          %p208 = pneg %p100
        $region18: #{tpu_custom_call.1} parent=11 // pred_check_branch
          %210 = sbr.rel (%p208) target = $region20
        $region19: #{tpu_custom_call.1} parent=11 // pred_region
          _
        $region20: #{tpu_custom_call.1} parent=11 // pred_fallthru
          _
      $region12: #{tpu_custom_call.1} parent=5 // pred_fallthru
        _
      %p211 = scmp.lt.s32.totalorder %s18, 2
      // Predicated region
      $region21: #{tpu_custom_call.1} parent=5 // pred_check
        %p212 = pneg %p211
      $region22: #{tpu_custom_call.1} parent=5 // pred_check_branch
        %214 = sbr.rel (%p212) target = $region24
      $region23: #{tpu_custom_call.1} parent=5 // pred_region
        // Predicated region
        $region25: #{tpu_custom_call.1} parent=23 // pred_check
          %p215 = pneg %p52
        $region26: #{tpu_custom_call.1} parent=23 // pred_check_branch
          %217 = sbr.rel (%p215) target = $region28
        $region27: #{tpu_custom_call.1} parent=23 // pred_region
          %s218 = sand.u32 %s42, 1
          %s219 = scalar_lea.sflag [#allocation3], %s218
          %s220 = sand.u32 %s42, 1
          %s221 = smul.addr %s220, 8
          %s222 = scalar_lea.vmem [#allocation2], %s221
          %s224 = ssub.s32 128, 128
          %225 = vsyncadd %s219, %s224
          %s226 = sadd.s32 %s26, %s25
          %s227 = smul.addr %s226, 128
          %s228 = scalar_lea.hbm %s0, %s227
          %s230 = sshll.u32 %s222, 4
          %s231 = int_to_ptr.vmem [resolvable:$true] %s230
          %233 = dma.hbm_to_vmem [thread:$0]  %s228, 128, %s231, %s219
        $region28: #{tpu_custom_call.1} parent=23 // pred_fallthru
          _
        // Predicated region
        $region29: #{tpu_custom_call.1} parent=23 // pred_check
          %p234 = pneg %p120
        $region30: #{tpu_custom_call.1} parent=23 // pred_check_branch
          %236 = sbr.rel (%p234) target = $region32
        $region31: #{tpu_custom_call.1} parent=23 // pred_region
          %p237 = scmp.lt.s32.totalorder %s25, 1
          %s238 = scalar_select %p237, %s25, 1
          %s239 = scalar_lea.vmem %s3, %s238
        $region32: #{tpu_custom_call.1} parent=23 // pred_fallthru
          _
        // Predicated region
        $region33: #{tpu_custom_call.1} parent=23 // pred_check
          %p240 = pneg %p146
        $region34: #{tpu_custom_call.1} parent=23 // pred_check_branch
          %242 = sbr.rel (%p240) target = $region36
        $region35: #{tpu_custom_call.1} parent=23 // pred_region
          %p243 = scmp.lt.s32.totalorder %s25, 1
          %s244 = scalar_select %p243, %s25, 1
          %s245 = scalar_lea.vmem %s4, %s244
        $region36: #{tpu_custom_call.1} parent=23 // pred_fallthru
          _
      $region24: #{tpu_custom_call.1} parent=5 // pred_fallthru
        _
      %p246 = scmp.le.s32.totalorder 1, %s18
      %p247 = scmp.lt.s32.totalorder %s18, 3
      %p248 = pnand %p246, %p247
      %p249 = pneg %p248
      // Predicated region
      $region37: #{tpu_custom_call.1} parent=5 // pred_check
        _
      $region38: #{tpu_custom_call.1} parent=5 // pred_check_branch
        %251 = sbr.rel (%p248) target = $region40
      $region39: #{tpu_custom_call.1} parent=5 // pred_region
        %s252 = ssub.s32 %s18, 1
        %s253 = sand.u32 %s45, 1
        %s254 = scalar_lea.sflag [#allocation3], %s253
        %s255 = sand.u32 %s45, 1
        %s256 = smul.addr %s255, 8
        %s257 = scalar_lea.vmem [#allocation2], %s256
        // Predicated region
        $region41: #{tpu_custom_call.1} parent=39 // pred_check
          %p258 = pneg %p58
        $region42: #{tpu_custom_call.1} parent=39 // pred_check_branch
          %260 = sbr.rel (%p258) target = $region44
        $region43: #{tpu_custom_call.1} parent=39 // pred_region
          %261 = dma.done %s254, 128
        $region44: #{tpu_custom_call.1} parent=39 // pred_fallthru
          _
        // Predicated region
        $region45: #{tpu_custom_call.1} parent=39 // pred_check
          %p262 = pneg %p79
        $region46: #{tpu_custom_call.1} parent=39 // pred_check_branch
          %264 = sbr.rel (%p262) target = $region48
        $region47: #{tpu_custom_call.1} parent=39 // pred_region
          %265 = dma.done [#allocation6], 256
        $region48: #{tpu_custom_call.1} parent=39 // pred_fallthru
          _
        %s266 = sand.u32 %s45, 1
        %s267 = scalar_lea.sflag [#allocation3], %s266
        %s268 = sand.u32 %s45, 1
        %s269 = smul.addr %s268, 8
        %s270 = scalar_lea.vmem [#allocation2], %s269
        %p271 = pneg %p58
        %p272 = pneg %p55
        %p273 = pneg %p79
        %p274 = pneg %p76
        %p275 = pneg %p100
        %p276 = pneg %p97
        %p277 = scmp.lt.s32.totalorder %s27, 1
        %s278 = scalar_select %p277, %s27, 1
        %s279 = scalar_lea.vmem %s3, %s278
        %p280 = pneg %p126
        %p281 = pneg %p123
        %p282 = scmp.lt.s32.totalorder %s27, 1
        %s283 = scalar_select %p282, %s27, 1
        %s284 = scalar_lea.vmem %s4, %s283
        %p285 = pneg %p152
        %p286 = pneg %p149
        %p287 = pneg %p180
        %p288 = pneg %p177
        %s289 = sand.u32 %s167, 1
        %s290 = scalar_lea.sflag [#allocation4], %s289
        %s291 = sand.u32 %s167, 1
        %s292 = smul.addr %s291, 8
        %s293 = scalar_lea.vmem [#allocation7], %s292
        %p294 = scmp.lt.s32.totalorder %s27, 1
        %s295 = scalar_select %p294, %s27, 1
        %s296 = scalar_lea.vmem %s3, %s295
        %p297 = scmp.lt.s32.totalorder %s27, 1
        %s298 = scalar_select %p297, %s27, 1
        %s299 = scalar_lea.vmem %s4, %s298
        %v300 = vld [vmem:[%s257] sm:$0xff]
        %v301 = vld [vmem:[#allocation5] sm:$0xff]
        %v302 = vld [vmem:[#allocation5 + $0x8] sm:$0xff]
        %v303 = vld [vmem:[%s2] sm:$0x1]
        %v305 = vlaneseq
        %v306 = vshrl.u32 %v305, 7
        %v307 = vsub.s32 0, %v306
        %v308 = vrot.slane %v303, %v307
        %vm310 = vcmask 130048
        %v312 = vsel %vm310, %v300, 0
        %314 = vmatprep.subr.mxu0 0.0
        %315 = vmatpush1.msra.mxu0 %v301
        %316 = vmatprep.subr.mxu0 0.0
        %317 = vmatpush1.msra.mxu0 %v302
        %318 = vmatprep.subr.mxu0 0.0
        %319 = vmatpush1.msra.mxu0 0.0
        %320 = vmatprep.subr.mxu0 0.0
        %321 = vmatpush1.msra.mxu0 0.0
        %322 = vmatprep.subr.mxu0 0.0
        %323 = vmatpush1.msra.mxu0 0.0
        %324 = vmatprep.subr.mxu0 0.0
        %325 = vmatpush1.msra.mxu0 0.0
        %326 = vmatprep.subr.mxu0 0.0
        %327 = vmatpush1.msra.mxu0 0.0
        %328 = vmatprep.subr.mxu0 0.0
        %329 = vmatpush1.msra.mxu0 0.0
        %330 = vmatprep.subr.mxu0 0.0
        %331 = vmatpush1.msra.mxu0 0.0
        %332 = vmatprep.subr.mxu0 0.0
        %333 = vmatpush1.msra.mxu0 0.0
        %334 = vmatprep.subr.mxu0 0.0
        %335 = vmatpush1.msra.mxu0 0.0
        %336 = vmatprep.subr.mxu0 0.0
        %337 = vmatpush1.msra.mxu0 0.0
        %338 = vmatprep.subr.mxu0 0.0
        %339 = vmatpush1.msra.mxu0 0.0
        %340 = vmatprep.subr.mxu0 0.0
        %341 = vmatpush1.msra.mxu0 0.0
        %342 = vmatprep.subr.mxu0 0.0
        %343 = vmatpush1.msra.mxu0 0.0
        %344 = vmatprep.subr.mxu0 0.0
        %345 = vmatpush1.msra.mxu0 0.0
        %346 = vmatprep.subr.mxu0 0.0
        %347 = vmatpush1.msra.mxu0 0.0
        %348 = vmatprep.subr.mxu0 0.0
        %349 = vmatpush1.msra.mxu0 0.0
        %350 = vmatprep.subr.mxu0 0.0
        %351 = vmatpush1.msra.mxu0 0.0
        %352 = vmatprep.subr.mxu0 0.0
        %353 = vmatpush1.msra.mxu0 0.0
        %354 = vmatprep.subr.mxu0 0.0
        %355 = vmatpush1.msra.mxu0 0.0
        %356 = vmatprep.subr.mxu0 0.0
        %357 = vmatpush1.msra.mxu0 0.0
        %358 = vmatprep.subr.mxu0 0.0
        %359 = vmatpush1.msra.mxu0 0.0
        %360 = vmatprep.subr.mxu0 0.0
        %361 = vmatpush1.msra.mxu0 0.0
        %362 = vmatprep.subr.mxu0 0.0
        %363 = vmatpush1.msra.mxu0 0.0
        %364 = vmatprep.subr.mxu0 0.0
        %365 = vmatpush1.msra.mxu0 0.0
        %366 = vmatprep.subr.mxu0 0.0
        %367 = vmatpush1.msra.mxu0 0.0
        %368 = vmatprep.subr.mxu0 0.0
        %369 = vmatpush1.msra.mxu0 0.0
        %370 = vmatprep.subr.mxu0 0.0
        %371 = vmatpush1.msra.mxu0 0.0
        %372 = vmatprep.subr.mxu0 0.0
        %373 = vmatpush1.msra.mxu0 0.0
        %374 = vmatprep.subr.mxu0 0.0
        %375 = vmatpush1.msra.mxu0 0.0
        %376 = vmatprep.subr.mxu0 0.0
        %377 = vmatpush1.msra.mxu0 0.0
        %378 = vmatprep.mubr.f32.mxu0 0.0
        %379 = vmatmul.mubr.f32.gmra.mrb[0].mxu0 %v312
        %v380 = vpop.f32.mrb[0].mxu0
        %v381 = vadd.f32 %v308, %v380
        %v382 = vpop.f32.mrb[0].mxu0
        %383 = vdwg.mxu0
        %v384 = vld [vmem:[%s296] sm:$0x1]
        %v386 = vlaneseq
        %v387 = vshrl.u32 %v386, 7
        %v388 = vsub.s32 0, %v387
        %v389 = vrot.slane %v384, %v388
        %v391 = vmul.f32 %v389, %v381
        %v392 = vld [vmem:[%s299] sm:$0x1]
        %v394 = vlaneseq
        %v395 = vshrl.u32 %v394, 7
        %v396 = vsub.s32 0, %v395
        %v397 = vrot.slane %v392, %v396
        %v399 = vadd.f32 %v391, %v397
        %v400 = vand.u32 2147483647, %v399
        %vm401 = vcmp.le.f32.partialorder %v400, 0.7853982
        %vm402 = vcmp.lt.s32.totalorder %v399, 0
        %v403 = vand.u32 %v399, 2139095040
        %v404 = vshrl.u32 %v403, 23
        %v405 = vsub.s32 %v404, 127
        %v406 = vand.u32 2147483647, %v399
        %v407 = vand.u32 %v406, 8388607
        %v408 = vor.u32 %v407, 8388608
        %v409 = vsub.s32 0, %v408
        %v410 = vadd.s32 %v405, 1
        %vm411 = vcmp.gt.s32.totalorder %v410, 0
        %v412 = vsel %vm411, %v410, 0
        %v413 = vshrl.u32 %v412, 5
        %v414 = vand.u32 %v412, 31
        %v415 = vsub.s32 32, %v414
        %v416 = vshrl.u32 683565275, %v415
        %v417 = vshll.u32 683565275, %v414
        %v418 = vshrl.u32 2475754826, %v415
        %v419 = vor.u32 %v417, %v418
        %v420 = vshll.u32 2475754826, %v414
        %v421 = vshrl.u32 2131351028, %v415
        %v422 = vor.u32 %v420, %v421
        %v423 = vshll.u32 2131351028, %v414
        %v424 = vshrl.u32 2102212464, %v415
        %v425 = vor.u32 %v423, %v424
        %v426 = vshll.u32 2102212464, %v414
        %v427 = vshrl.u32 920167782, %v415
        %v428 = vor.u32 %v426, %v427
        %v429 = vshll.u32 920167782, %v414
        %v430 = vshrl.u32 1326507024, %v415
        %v431 = vor.u32 %v429, %v430
        %vm432 = vcmp.lt.s32.totalorder %v413, 1
        %vm433 = vcmp.lt.s32.totalorder %v413, 2
        %vm434 = vcmp.lt.s32.totalorder %v413, 3
        %vm435 = vcmp.lt.s32.totalorder %v413, 4
        %v436 = vsel %vm432, %v416, %v419
        %v437 = vsel %vm435, %v425, 2102212464
        %v438 = vsel %vm434, %v422, %v437
        %v439 = vsel %vm433, %v436, %v438
        %v440 = vsel %vm432, %v419, %v422
        %v441 = vsel %vm435, %v428, 920167782
        %v442 = vsel %vm434, %v425, %v441
        %v443 = vsel %vm433, %v440, %v442
        %v444 = vsel %vm432, %v422, %v425
        %v445 = vsel %vm435, %v431, 1326507024
        %v446 = vsel %vm434, %v428, %v445
        %v447 = vsel %vm433, %v444, %v446
        %v448 = vshll.u32 %v408, 8
        %v449 = vmul.u32.u64.compose %v448, %v447
        %v450 = vextract.low.u32 %v449
        %v451 = vextract.high.u32 %v449
        %v452 = vmul.u32.u64.compose %v448, %v443
        %v453 = vextract.low.u32 %v452
        %v454 = vextract.high.u32 %v452
        %v455 = vmul.u32 %v448, %v439
        %v456 = vadd.s32 %v451, %v453
        %vm457 = vc.u32 %v451, %v453
        %v458 = vadd.s32 %v454, 1
        %v459 = vsel %vm457, %v458, %v454
        %v460 = vadd.s32 %v455, %v459
        %v461 = vadd.s32 %v460, 536870912
        %v462 = vshrl.u32 %v461, 30
        %v463 = vshll.u32 %v462, 30
        %v464 = vsub.s32 %v460, %v463
        %vm465 = vcmp.lt.s32.totalorder %v464, 0
        %v466 = vsub.s32 0, %v464
        %v467 = vsel %vm465, %v466, %v464
        %v468 = vclz %v467
        %v469 = vsub.s32 %v468, 2
        %vm470 = vcmp.gt.s32.totalorder 0, %v469
        %v471 = vsel %vm470, 0, %v469
        %v472 = vsub.s32 32, %v471
        %v473 = vshll.u32 %v464, %v471
        %v474 = vshrl.u32 %v456, %v472
        %v475 = vor.u32 %v473, %v474
        %v476 = vsub.s32 4294967266, %v471
        %v477 = vadd.s32 %v476, 127
        %v478 = vshll.u32 %v477, 23
        %v479 = vor.u32 4788187, %v478
        %v480 = vand.u32 2147483647, %v479
        %v482 = vcvt.s32.f32 %v475
        %v483 = vmul.f32 %v482, %v480
        %v484 = vxor.u32 %v483, 2147483648
        %v485 = vsel %vm402, %v484, %v483
        %v486 = vsub.s32 4, %v462
        %v487 = vsel %vm402, %v486, %v462
        %v488 = vsel %vm401, %v399, %v485
        %v489 = vsel %vm401, 0, %v487
        %v490 = vcosq.f32.pop %v488
        %v491 = vsinq.f32.pop %v488
        %vm492 = vweird.f32 %v399
        %v493 = vadd.s32 %v489, 3
        %v494 = vand.u32 %v493, 3
        %vm495 = vcmp.lt.s32.totalorder %v494, 2
        %vm496 = vcmp.eq.s32.totalorder %v494, 0
        %v497 = vxor.u32 %v491, 2147483648
        %v498 = vsel %vm496, %v490, %v497
        %vm499 = vcmp.eq.s32.totalorder %v494, 2
        %v500 = vxor.u32 %v490, 2147483648
        %v501 = vsel %vm499, %v500, %v491
        %v502 = vsel %vm495, %v498, %v501
        %v503 = vsel %vm492, nan, %v502
        %vm504 = vcmask 261120
        %505 = vst.msk [vmem:[%s293] sm:$0xff] %vm504, %v503
        %s506 = sand.u32 %s167, 1
        %s507 = scalar_lea.sflag [#allocation4], %s506
        %s508 = sand.u32 %s167, 1
        %s509 = smul.addr %s508, 8
        %s510 = scalar_lea.vmem [#allocation7], %s509
        // Predicated region
        $region49: #{tpu_custom_call.1} parent=39 // pred_check
          %p511 = pneg %p177
        $region50: #{tpu_custom_call.1} parent=39 // pred_check_branch
          %513 = sbr.rel (%p511) target = $region52
        $region51: #{tpu_custom_call.1} parent=39 // pred_region
          %s515 = ssub.s32 128, 128
          %516 = vsyncadd %s507, %s515
          %s517 = sadd.s32 %s28, %s27
          %s518 = smul.addr %s517, 128
          %s519 = scalar_lea.hbm %s5, %s518
          %s521 = sshll.u32 %s510, 4
          %s522 = int_to_ptr.vmem [resolvable:$true] %s521
          %524 = dma.vmem_to_hbm [thread:$0]  %s522, 128, %s519, %s507
        $region52: #{tpu_custom_call.1} parent=39 // pred_fallthru
          _
      $region40: #{tpu_custom_call.1} parent=5 // pred_fallthru
        _
      %p525 = scmp.le.s32.totalorder 2, %s18
      // Predicated region
      $region53: #{tpu_custom_call.1} parent=5 // pred_check
        %p526 = pneg %p525
      $region54: #{tpu_custom_call.1} parent=5 // pred_check_branch
        %528 = sbr.rel (%p526) target = $region56
      $region55: #{tpu_custom_call.1} parent=5 // pred_region
        %s529 = ssub.s32 %s18, 2
        // Predicated region
        $region57: #{tpu_custom_call.1} parent=55 // pred_check
          %p530 = pneg %p183
        $region58: #{tpu_custom_call.1} parent=55 // pred_check_branch
          %532 = sbr.rel (%p530) target = $region60
        $region59: #{tpu_custom_call.1} parent=55 // pred_region
          %s533 = sand.u32 %s168, 1
          %s534 = scalar_lea.sflag [#allocation4], %s533
          %s535 = sand.u32 %s168, 1
          %s536 = smul.addr %s535, 8
          %s537 = scalar_lea.vmem [#allocation7], %s536
          %538 = dma.done %s534, 128
        $region60: #{tpu_custom_call.1} parent=55 // pred_fallthru
          _
      $region56: #{tpu_custom_call.1} parent=5 // pred_fallthru
        _
    $region6: #{tpu_custom_call.1} parent=1 // loop_footer
      %s22 = sadd.s32 1, %s18
    $region7: #{tpu_custom_call.1} parent=1 // loop_footer_branch
      %17 = sbr.rel target = $region3
    $region8: #{tpu_custom_call.1} parent=1 // loop_exit
      _
    %539 = vsyncpa [#allocation3], 1
    %s540 = scalar_lea.sflag [#allocation3], 1
    %541 = vsyncpa %s540, 1
    %542 = vsyncpa [#allocation6], 1
    %543 = vsyncpa [#allocation4], 1
    %s544 = scalar_lea.sflag [#allocation4], 1
    %545 = vsyncpa %s544, 1

</llo_original>
